<compile_context>
chip_gen: v6e
topology: v6e:2x2x1
jax: 0.10.0
libtpu: 0.0.40
codegen_flags: <defaults>
</compile_context>

<pallas_src>
import functools

import jax
import jax.numpy as jnp
from jax.experimental import pallas as pl
from jax.experimental.pallas import tpu as pltpu


def _round_up(x, m):
    return ((x + m - 1) // m) * m


# --------------------------------------------------------------------------------------
# Kernel: one (batch, N-tile) grid step.
# --------------------------------------------------------------------------------------
def _conv_bn_act_kernel(x_ref, w_ref, scale_ref, bias_ref, o_ref,
                        win_ref, xcol_ref, *,
                        c_in, tile_n, win_n, offsets, act):
    """
    x_ref    : (1, C_in, L_alloc)  bf16  -- whole padded/flattened image of batch b (resident)
    w_ref    : (C_out, K)          bf16  -- im2col-flattened weights (resident)
    scale_ref: (C_out, 1)          f32   -- folded BN scale
    bias_ref : (C_out, 1)          f32   -- folded BN bias
    o_ref    : (1, C_out, tile_n)  f32
    win_ref  : (C_in, win_n)       bf16  -- scratch: current tile window + halo
    xcol_ref : (K, tile_n)         bf16  -- scratch: in-VMEM im2col tile
    """
    j = pl.program_id(1)
    n0 = pl.multiple_of(j * tile_n, tile_n)        # lane-aligned dynamic start

    # Stage tile + halo once: single aligned dynamic slice of the resident image.
    win_ref[...] = x_ref[0, :, pl.ds(n0, win_n)]

    # In-VMEM im2col: KH*KW static (constant-offset) slices of the window.
    for t, off in enumerate(offsets):
        xcol_ref[t * c_in:(t + 1) * c_in, :] = win_ref[:, off:off + tile_n]

    # Single MXU matmul over the fused contraction K = KH*KW*C_in (bf16 in, f32 acc).
    acc = jnp.dot(w_ref[...], xcol_ref[...], preferred_element_type=jnp.float32)

    # Fused (folded) BatchNorm + optional ReLU epilogue, one store.
    y = acc * scale_ref[...] + bias_ref[...]
    if act:
        y = jnp.maximum(y, 0.0)
    o_ref[0, :, :] = y.astype(o_ref.dtype)


# --------------------------------------------------------------------------------------
# Generation-aware VMEM budget & tile selection.
# --------------------------------------------------------------------------------------
def _vmem_budget_bytes():
    try:
        cap = int(pltpu.get_tpu_info().vmem_capacity_bytes)
    except Exception:
        cap = 64 * 1024 * 1024               # conservative: v7x physical VMEM per core
    budget = min(cap * 3 // 8, 48 * 1024 * 1024)   # ~24 MiB on v7x, 48 MiB on v5e/v6e
    limit = min(cap * 3 // 4, 96 * 1024 * 1024)    # raise scoped VMEM limit explicitly
    return budget, limit


def _pick_tile_n(n_out, batch, k, c_in, c_out, halo, budget):
    halo_pad = _round_up(max(halo, 1), 128)
    n128 = max(128, _round_up(n_out, 128))
    feasible = []
    for t in (2048, 1024, 512, 256, 128):
        if t > n128:
            continue
        n_pad = _round_up(n_out, t)
        l_alloc = n_pad + halo_pad
        need = (2 * c_in * l_alloc * 2        # image (double-buffered input, bf16)
                + 2 * c_out * k * 2           # weights (double-buffered, bf16)
                + 2 * c_out * t * 4           # output tile (double-buffered, f32)
                + k * t * 2                   # xcol scratch (bf16)
                + c_in * (t + halo_pad) * 2   # window scratch (bf16)
                + (1 << 20))                  # slack
        if need <= budget:
            feasible.append((t, batch * (n_pad // t)))
    if not feasible:
        return 128
    # Prefer >=4 grid blocks (>=2 per TensorCore on v7x), then >=2, then anything.
    for min_blocks in (4, 2, 1):
        ok = [t for t, blocks in feasible if blocks >= min_blocks]
        if ok:
            return max(ok)
    return max(t for t, _ in feasible)


# --------------------------------------------------------------------------------------
# Wrapper: conv + BN(eval) + ReLU, NCHW in / NCHW out.
# --------------------------------------------------------------------------------------
def conv2d_bn_act(x, w, gamma, beta, running_mean, running_var, *,
                  padding=1, dilation=1, eps=1e-5, act=True):
    """x: (B, C_in, H, W); w: (C_out, C_in, KH, KW); BN params: (C_out,)."""
    B, C_in, H, W = x.shape
    C_out, _, KH, KW = w.shape
    H_pad, W_pad = H + 2 * padding, W + 2 * padding
    H_out = H + 2 * padding - dilation * (KH - 1)
    W_out = W + 2 * padding - dilation * (KW - 1)
    K = KH * KW * C_in

    # Flattened-spatial formulation: compute output rows with stride W_pad; the last
    # (W_pad - W_out) columns of every row are garbage and sliced off at the end.
    N_out = H_out * W_pad
    offsets = tuple(ky * dilation * W_pad + kx * dilation
                    for ky in range(KH) for kx in range(KW))
    halo = max(offsets)

    budget, vmem_limit = _vmem_budget_bytes()
    tile_n = _pick_tile_n(N_out, B, K, C_in, C_out, halo, budget)
    halo_pad = _round_up(max(halo, 1), 128)
    win_n = tile_n + halo_pad
    n_pad = _round_up(N_out, tile_n)
    L_pad = H_pad * W_pad
    L_alloc = n_pad + halo_pad

    # ---- activations: one cheap spatial pad + flatten (no 9x im2col in HBM), bf16 ----
    x_pad = jnp.pad(x, ((0, 0), (0, 0), (padding, padding), (padding, padding)))
    x_flat = x_pad.reshape(B, C_in, L_pad).astype(jnp.bfloat16)
    x_flat = jnp.pad(x_flat, ((0, 0), (0, 0), (0, L_alloc - L_pad)))

    # ---- weights: (C_out, C_in, KH, KW) -> (C_out, K) matching [tap][ci] order, bf16 ----
    w_col = jnp.transpose(w, (0, 2, 3, 1)).reshape(C_out, K).astype(jnp.bfloat16)

    # ---- fold eval-mode BatchNorm into per-channel scale / bias (f32 epilogue) ----
    scale = (gamma * jax.lax.rsqrt(running_var + eps)).astype(jnp.float32).reshape(C_out, 1)
    bias = (beta.astype(jnp.float32) - running_mean.astype(jnp.float32) * scale[:, 0]
            ).reshape(C_out, 1)

    grid = (B, n_pad // tile_n)
    kernel = functools.partial(_conv_bn_act_kernel, c_in=C_in, tile_n=tile_n,
                               win_n=win_n, offsets=offsets, act=act)

    out = pl.pallas_call(
        kernel,
        out_shape=jax.ShapeDtypeStruct((B, C_out, n_pad), jnp.float32),
        grid_spec=pltpu.PrefetchScalarGridSpec(
            num_scalar_prefetch=0,
            grid=grid,
            in_specs=[
                # Whole padded image of batch b; index constant across the inner axis,
                # so it is DMA'd from HBM once per batch and stays resident in VMEM.
                pl.BlockSpec((1, C_in, L_alloc), lambda b, j: (b, 0, 0)),
                pl.BlockSpec((C_out, K), lambda b, j: (0, 0)),      # weights (resident)
                pl.BlockSpec((C_out, 1), lambda b, j: (0, 0)),      # BN scale
                pl.BlockSpec((C_out, 1), lambda b, j: (0, 0)),      # BN bias
            ],
            out_specs=pl.BlockSpec((1, C_out, tile_n), lambda b, j: (b, 0, j)),
            scratch_shapes=[
                pltpu.VMEM((C_in, win_n), jnp.bfloat16),            # tile window + halo
                pltpu.VMEM((K, tile_n), jnp.bfloat16),              # in-VMEM im2col tile
            ],
        ),
        compiler_params=pltpu.CompilerParams(
            dimension_semantics=("parallel", "parallel"),
            vmem_limit_bytes=int(vmem_limit)),
    )(x_flat, w_col, scale, bias)

    # Batch-major already: drop N padding and the garbage row-tail columns (no transpose).
    out = out[:, :, :N_out].reshape(B, C_out, H_out, W_pad)[:, :, :, :W_out]
    return out


# --------------------------------------------------------------------------------------
# Pure-JAX reference of the PyTorch forward (eval-mode BN), NCHW.
# --------------------------------------------------------------------------------------
def _reference(x, w, gamma, beta, mean, var, eps, padding, dilation, act):
    dn = jax.lax.conv_dimension_numbers(x.shape, w.shape, ("NCHW", "OIHW", "NCHW"))
    y = jax.lax.conv_general_dilated(
        x, w, window_strides=(1, 1),
        padding=((padding, padding), (padding, padding)),
        rhs_dilation=(dilation, dilation), dimension_numbers=dn)
    y = (y - mean[None, :, None, None]) * jax.lax.rsqrt(var + eps)[None, :, None, None]
    y = y * gamma[None, :, None, None] + beta[None, :, None, None]
    if act:
        y = jnp.maximum(y, 0.0)
    return y


if __name__ == "__main__":
    B, C_in, C_out, H, W = 2, 4, 8, 16, 16

    key = jax.random.PRNGKey(0)
    kx, kw, kg, kb, km, kv = jax.random.split(key, 6)

    x = jax.random.normal(kx, (B, C_in, H, W), dtype=jnp.float32)
    w = jax.random.normal(kw, (C_out, C_in, 3, 3), dtype=jnp.float32) * (
        1.0 / jnp.sqrt(9.0 * C_in))
    gamma = 1.0 + 0.1 * jax.random.normal(kg, (C_out,), dtype=jnp.float32)
    beta = 0.1 * jax.random.normal(kb, (C_out,), dtype=jnp.float32)
    running_mean = 0.1 * jax.random.normal(km, (C_out,), dtype=jnp.float32)
    running_var = jax.nn.softplus(jax.random.normal(kv, (C_out,), dtype=jnp.float32)) + 0.5
    eps = 1e-5

    y = conv2d_bn_act(x, w, gamma, beta, running_mean, running_var,
                      padding=1, dilation=1, eps=eps, act=True)
    jax.block_until_ready(y)

    y_ref = _reference(x, w, gamma, beta, running_mean, running_var, eps, 1, 1, True)
    assert y.shape == y_ref.shape, "shape mismatch vs reference"
    # bf16 matmul operands (f32 accumulation) -> relaxed tolerance vs the f32 reference.
    max_err = float(jnp.max(jnp.abs(y - y_ref)))
    assert jnp.allclose(y, y_ref, atol=5e-2, rtol=5e-2), (
        f"mismatch vs reference (max abs err {max_err})")

    print("KERNEL_OK")
</pallas_src>

<mosaic_0001>
module attributes {stable_mosaic.version = 11 : i64} {
  func.func @_conv_bn_act_kernel(%arg0: i32, %arg1: i32, %arg2: memref<1x4x640xbf16, #tpu.memory_space<vmem>>, %arg3: memref<8x36xbf16, #tpu.memory_space<vmem>>, %arg4: memref<8x1xf32, #tpu.memory_space<vmem>>, %arg5: memref<8x1xf32, #tpu.memory_space<vmem>>, %arg6: memref<1x8x256xf32, #tpu.memory_space<vmem>>, %arg7: memref<4x384xbf16, #tpu.memory_space<vmem>>, %arg8: memref<36x256xbf16, #tpu.memory_space<vmem>>) attributes {dimension_semantics = [#tpu.dimension_semantics<parallel>, #tpu.dimension_semantics<parallel>], iteration_bounds = array<i64: 2, 2>, scalar_prefetch = 0 : i64, scratch_operands = 2 : i64, tpu.core_type = #tpu.core_type<tc>, window_params = [{transform_indices = @transform_0, window_bounds = array<i64: 1, 4, 640>}, {pipeline_mode = #tpu.pipeline_mode<synchronous>, transform_indices = @transform_1, window_bounds = array<i64: 8, 36>}, {pipeline_mode = #tpu.pipeline_mode<synchronous>, transform_indices = @transform_2, window_bounds = array<i64: 8, 1>}, {pipeline_mode = #tpu.pipeline_mode<synchronous>, transform_indices = @transform_3, window_bounds = array<i64: 8, 1>}, {transform_indices = @transform_4, window_bounds = array<i64: 1, 8, 256>}]} {
    %c256_i32 = arith.constant 256 : i32
    %0 = arith.muli %arg1, %c256_i32 : i32
    %1 = tpu.assume_multiple %0, 256 : i32
    %c0 = arith.constant 0 : index
    %c0_0 = arith.constant 0 : index
    %2 = arith.index_cast %1 : i32 to index
    %3 = vector.load %arg2[%c0, %c0_0, %2] : memref<1x4x640xbf16, #tpu.memory_space<vmem>>, vector<1x4x384xbf16>
    %4 = vector.shape_cast %3 : vector<1x4x384xbf16> to vector<4x384xbf16>
    %c0_1 = arith.constant 0 : index
    %c0_2 = arith.constant 0 : index
    %5 = vector.load %arg7[%c0_1, %c0_2] : memref<4x384xbf16, #tpu.memory_space<vmem>>, vector<4x384xbf16>
    tpu.vector_store %arg7[%c0_1, %c0_2], %4 {strides = array<i32>} : memref<4x384xbf16, #tpu.memory_space<vmem>>, vector<4x384xbf16>,
    %c0_3 = arith.constant 0 : index
    %c0_4 = arith.constant 0 : index
    %6 = vector.load %arg7[%c0_3, %c0_4] : memref<4x384xbf16, #tpu.memory_space<vmem>>, vector<4x256xbf16>
    %c0_5 = arith.constant 0 : index
    %c0_6 = arith.constant 0 : index
    %7 = vector.load %arg8[%c0_5, %c0_6] : memref<36x256xbf16, #tpu.memory_space<vmem>>, vector<4x256xbf16>
    tpu.vector_store %arg8[%c0_5, %c0_6], %6 {strides = array<i32>} : memref<36x256xbf16, #tpu.memory_space<vmem>>, vector<4x256xbf16>,
    %c0_7 = arith.constant 0 : index
    %c1 = arith.constant 1 : index
    %8 = vector.load %arg7[%c0_7, %c1] : memref<4x384xbf16, #tpu.memory_space<vmem>>, vector<4x256xbf16>
    %c4 = arith.constant 4 : index
    %c0_8 = arith.constant 0 : index
    %9 = vector.load %arg8[%c4, %c0_8] : memref<36x256xbf16, #tpu.memory_space<vmem>>, vector<4x256xbf16>
    tpu.vector_store %arg8[%c4, %c0_8], %8 {strides = array<i32>} : memref<36x256xbf16, #tpu.memory_space<vmem>>, vector<4x256xbf16>,
    %c0_9 = arith.constant 0 : index
    %c2 = arith.constant 2 : index
    %10 = vector.load %arg7[%c0_9, %c2] : memref<4x384xbf16, #tpu.memory_space<vmem>>, vector<4x256xbf16>
    %c8 = arith.constant 8 : index
    %c0_10 = arith.constant 0 : index
    %11 = vector.load %arg8[%c8, %c0_10] : memref<36x256xbf16, #tpu.memory_space<vmem>>, vector<4x256xbf16>
    tpu.vector_store %arg8[%c8, %c0_10], %10 {strides = array<i32>} : memref<36x256xbf16, #tpu.memory_space<vmem>>, vector<4x256xbf16>,
    %c0_11 = arith.constant 0 : index
    %c18 = arith.constant 18 : index
    %12 = vector.load %arg7[%c0_11, %c18] : memref<4x384xbf16, #tpu.memory_space<vmem>>, vector<4x256xbf16>
    %c12 = arith.constant 12 : index
    %c0_12 = arith.constant 0 : index
    %13 = vector.load %arg8[%c12, %c0_12] : memref<36x256xbf16, #tpu.memory_space<vmem>>, vector<4x256xbf16>
    tpu.vector_store %arg8[%c12, %c0_12], %12 {strides = array<i32>} : memref<36x256xbf16, #tpu.memory_space<vmem>>, vector<4x256xbf16>,
    %c0_13 = arith.constant 0 : index
    %c19 = arith.constant 19 : index
    %14 = vector.load %arg7[%c0_13, %c19] : memref<4x384xbf16, #tpu.memory_space<vmem>>, vector<4x256xbf16>
    %c16 = arith.constant 16 : index
    %c0_14 = arith.constant 0 : index
    %15 = vector.load %arg8[%c16, %c0_14] : memref<36x256xbf16, #tpu.memory_space<vmem>>, vector<4x256xbf16>
    tpu.vector_store %arg8[%c16, %c0_14], %14 {strides = array<i32>} : memref<36x256xbf16, #tpu.memory_space<vmem>>, vector<4x256xbf16>,
    %c0_15 = arith.constant 0 : index
    %c20 = arith.constant 20 : index
    %16 = vector.load %arg7[%c0_15, %c20] : memref<4x384xbf16, #tpu.memory_space<vmem>>, vector<4x256xbf16>
    %c20_16 = arith.constant 20 : index
    %c0_17 = arith.constant 0 : index
    %17 = vector.load %arg8[%c20_16, %c0_17] : memref<36x256xbf16, #tpu.memory_space<vmem>>, vector<4x256xbf16>
    tpu.vector_store %arg8[%c20_16, %c0_17], %16 {strides = array<i32>} : memref<36x256xbf16, #tpu.memory_space<vmem>>, vector<4x256xbf16>,
    %c0_18 = arith.constant 0 : index
    %c36 = arith.constant 36 : index
    %18 = vector.load %arg7[%c0_18, %c36] : memref<4x384xbf16, #tpu.memory_space<vmem>>, vector<4x256xbf16>
    %c24 = arith.constant 24 : index
    %c0_19 = arith.constant 0 : index
    %19 = vector.load %arg8[%c24, %c0_19] : memref<36x256xbf16, #tpu.memory_space<vmem>>, vector<4x256xbf16>
    tpu.vector_store %arg8[%c24, %c0_19], %18 {strides = array<i32>} : memref<36x256xbf16, #tpu.memory_space<vmem>>, vector<4x256xbf16>,
    %c0_20 = arith.constant 0 : index
    %c37 = arith.constant 37 : index
    %20 = vector.load %arg7[%c0_20, %c37] : memref<4x384xbf16, #tpu.memory_space<vmem>>, vector<4x256xbf16>
    %c28 = arith.constant 28 : index
    %c0_21 = arith.constant 0 : index
    %21 = vector.load %arg8[%c28, %c0_21] : memref<36x256xbf16, #tpu.memory_space<vmem>>, vector<4x256xbf16>
    tpu.vector_store %arg8[%c28, %c0_21], %20 {strides = array<i32>} : memref<36x256xbf16, #tpu.memory_space<vmem>>, vector<4x256xbf16>,
    %c0_22 = arith.constant 0 : index
    %c38 = arith.constant 38 : index
    %22 = vector.load %arg7[%c0_22, %c38] : memref<4x384xbf16, #tpu.memory_space<vmem>>, vector<4x256xbf16>
    %c32 = arith.constant 32 : index
    %c0_23 = arith.constant 0 : index
    %23 = vector.load %arg8[%c32, %c0_23] : memref<36x256xbf16, #tpu.memory_space<vmem>>, vector<4x256xbf16>
    tpu.vector_store %arg8[%c32, %c0_23], %22 {strides = array<i32>} : memref<36x256xbf16, #tpu.memory_space<vmem>>, vector<4x256xbf16>,
    %c0_24 = arith.constant 0 : index
    %c0_25 = arith.constant 0 : index
    %24 = vector.load %arg3[%c0_24, %c0_25] : memref<8x36xbf16, #tpu.memory_space<vmem>>, vector<8x36xbf16>
    %c0_26 = arith.constant 0 : index
    %c0_27 = arith.constant 0 : index
    %25 = vector.load %arg8[%c0_26, %c0_27] : memref<36x256xbf16, #tpu.memory_space<vmem>>, vector<36x256xbf16>
    %cst = arith.constant dense<0.000000e+00> : vector<8x256xf32>
    %26 = tpu.matmul %24, %25, %cst {dimension_numbers = #tpu.dot_dimension_numbers<[1], [0], [0], [1], [0, 0, 1, 1], [], []>} : vector<8x36xbf16>, vector<36x256xbf16>, vector<8x256xf32> -> vector<8x256xf32>
    %c0_28 = arith.constant 0 : index
    %c0_29 = arith.constant 0 : index
    %27 = vector.load %arg4[%c0_28, %c0_29] : memref<8x1xf32, #tpu.memory_space<vmem>>, vector<8x1xf32>
    %28 = vector.broadcast %27 : vector<8x1xf32> to vector<8x256xf32>
    %29 = arith.mulf %26, %28 : vector<8x256xf32>
    %c0_30 = arith.constant 0 : index
    %c0_31 = arith.constant 0 : index
    %30 = vector.load %arg5[%c0_30, %c0_31] : memref<8x1xf32, #tpu.memory_space<vmem>>, vector<8x1xf32>
    %31 = vector.broadcast %30 : vector<8x1xf32> to vector<8x256xf32>
    %32 = arith.addf %29, %31 : vector<8x256xf32>
    %cst_32 = arith.constant 0.000000e+00 : f32
    %33 = vector.broadcast %cst_32 : f32 to vector<8x256xf32>
    %34 = arith.maximumf %32, %33 : vector<8x256xf32>
    %c0_33 = arith.constant 0 : index
    %c0_34 = arith.constant 0 : index
    %c0_35 = arith.constant 0 : index
    %35 = vector.load %arg6[%c0_33, %c0_34, %c0_35] : memref<1x8x256xf32, #tpu.memory_space<vmem>>, vector<1x8x256xf32>
    %36 = vector.shape_cast %35 : vector<1x8x256xf32> to vector<8x256xf32>
    %37 = vector.shape_cast %34 : vector<8x256xf32> to vector<1x8x256xf32>
    tpu.vector_store %arg6[%c0_33, %c0_34, %c0_35], %37 {strides = array<i32>} : memref<1x8x256xf32, #tpu.memory_space<vmem>>, vector<1x8x256xf32>,
    return
  }
  func.func @transform_0(%arg0: i32, %arg1: i32) -> (i32, i32, i32) {
    %c0_i32 = arith.constant 0 : i32
    %c0_i32_0 = arith.constant 0 : i32
    %c0_i32_1 = arith.constant 0 : i32
    return %arg0, %c0_i32, %c0_i32_0 : i32, i32, i32
  }
  func.func @transform_1(%arg0: i32, %arg1: i32) -> (i32, i32) {
    %c0_i32 = arith.constant 0 : i32
    %c0_i32_0 = arith.constant 0 : i32
    %c0_i32_1 = arith.constant 0 : i32
    return %c0_i32, %c0_i32_0 : i32, i32
  }
  func.func @transform_2(%arg0: i32, %arg1: i32) -> (i32, i32) {
    %c0_i32 = arith.constant 0 : i32
    %c0_i32_0 = arith.constant 0 : i32
    %c0_i32_1 = arith.constant 0 : i32
    return %c0_i32, %c0_i32_0 : i32, i32
  }
  func.func @transform_3(%arg0: i32, %arg1: i32) -> (i32, i32) {
    %c0_i32 = arith.constant 0 : i32
    %c0_i32_0 = arith.constant 0 : i32
    %c0_i32_1 = arith.constant 0 : i32
    return %c0_i32, %c0_i32_0 : i32, i32
  }
  func.func @transform_4(%arg0: i32, %arg1: i32) -> (i32, i32, i32) {
    %c0_i32 = arith.constant 0 : i32
    %c0_i32_0 = arith.constant 0 : i32
    return %arg0, %c0_i32, %arg1 : i32, i32, i32
  }
}

</mosaic_0001>

<llo_original>
// kernel: tpu_custom_call.1
$region0: #{tpu_custom_call.1}
  #allocation0 [shape = 'u32[]', space=smem, size = 0x4, offset = 0x4, fixed_abs, tag = 'smem constant byte address 0x4 - core index']
  #allocation1 [shape = 'u32[144,128]{1,0:T(1,128)}', space=vmem, size = 0x12000, scoped, tag = 'internal scratch']
  #allocation2 [shape = 'bf16[4,384]{1,0:T(4,128)(2,1)}', space=vmem, size = 0xc00, scoped, tag = 'scratch operand']
  #allocation3 [shape = 'bf16[36,256]{1,0:T(8,128)(2,1)}', space=vmem, size = 0x5000, scoped, tag = 'scratch operand']
  %s0 = inlined_call_operand.hbm [shape: bf16[2,4,640], index: 0, kind: input, shape index: {}]
  %s1 = inlined_call_operand.vmem [shape: bf16[8,36], index: 1, kind: input, shape index: {}]
  %s2 = inlined_call_operand.vmem [shape: f32[8,1], index: 2, kind: input, shape index: {}]
  %s3 = inlined_call_operand.vmem [shape: f32[8,1], index: 3, kind: input, shape index: {}]
  %s4 = inlined_call_operand.hbm [shape: f32[2,8,512], index: 4, kind: output, shape index: {}]
  %s5 = sld [smem:[#allocation0]]
  $region53: #{tpu_custom_call.1} parent=0
    _
  %s7 = ssub.s32 1, %s5
  %s8 = scalar_select 0, %s7, %s5
  $region1: #{tpu_custom_call.1} parent=0
    #allocation4 [shape = 'u8[10240]{0}', space=vmem, size = 0x2800, scoped, tag = 'input window, operand 0']
    #allocation5 [shape = 's32[2]{0}', space=sflag, size = 0x8, scoped, tag = 'scoped memory for tpu_custom_call.1']
    #allocation6 [shape = 's32[2]{0}', space=sflag, size = 0x8, scoped, tag = 'scoped memory for tpu_custom_call.1']
    #allocation7 [shape = 'u8[16384]{0}', space=vmem, size = 0x4000, scoped, tag = 'output window, operand 0']
    %9 = vsyncpa [#allocation5], 0
    %s10 = scalar_lea.sflag [#allocation5], 1
    %11 = vsyncpa %s10, 0
    %12 = vsyncpa [#allocation6], 0
    %s13 = scalar_lea.sflag [#allocation6], 1
    %14 = vsyncpa %s13, 0
    loop: start=0, step=1, limit=6
    $region2: #{tpu_custom_call.1} parent=1 // loop_pre_header
      _
    $region3: #{tpu_custom_call.1} parent=1 // loop_header
      %s16 = sphi 0, %s20
      %p17 = scmp.ge.s32.totalorder %s16, 6
      %s23 = sphi 0, %s35
      %s24 = sphi 0, %s31
      %s25 = sphi 0, %s23
      %s26 = sphi 0, %s24
      %s27 = sphi 0, %s25
      %s28 = sphi 0, %s26
      %s38 = sphi 0, %s40
      %s41 = sphi 0, %s38
      %s42 = sphi 0, %s41
      %s58 = sphi 0, %s42
      %s62 = sphi 0, %s62
      %s64 = sphi 0, %s62
      %s65 = sphi 0, %s64
      %s79 = sphi 0, %s65
      %s83 = sphi 0, %s83
      %s85 = sphi 0, %s83
      %s86 = sphi 0, %s85
      %s100 = sphi 0, %s86
      %s104 = sphi 0, %s104
      %s106 = sphi 0, %s104
      %s107 = sphi 0, %s106
      %s121 = sphi 0, %s107
      %s129 = sphi 0, %s131
      %s132 = sphi 0, %s129
      %s133 = sphi 0, %s132
      %s149 = sphi 0, %s133
    $region4: #{tpu_custom_call.1} parent=1 // loop_header_branch
      %19 = sbr.rel (%p17) target = $region8
    $region5: #{tpu_custom_call.1} parent=1 // loop_body
      %s21 = ssub.s32 %s16, 1
      %s22 = ssub.s32 %s16, 2
      %s29 = sadd.s32 1, %s24
      %p30 = scmp.ge.s32.totalorder %s29, 2
      %s31 = scalar_select %p30, 0, %s29
      %s32 = sadd.s32 1, %s23
      %s33 = scalar_select %p30, %s32, %s23
      %p34 = scmp.ge.s32.totalorder %s33, 2
      %s35 = scalar_select %p34, 0, %s33
      %s36 = ssub.s32 %s23, %s35
      %p37 = scmp.eq.s32.totalorder %s36, 0
      %s39 = sadd.s32 %s38, 1
      %s40 = scalar_select %p37, %s38, %s39
      %p43 = pneg %p37
      %p44 = scmp.eq.s32.totalorder %s16, 3
      %p45 = por %p43, %p44
      %p46 = scmp.ne.s32.totalorder %s38, %s41
      %p47 = scmp.eq.s32.totalorder %s16, 0
      %p48 = por %p46, %p47
      %p49 = scmp.ne.s32.totalorder %s38, %s41
      %p50 = scmp.eq.s32.totalorder %s21, 3
      %p51 = por %p49, %p50
      %p52 = scmp.ne.s32.totalorder %s41, %s42
      %p53 = scmp.eq.s32.totalorder %s21, 0
      %p54 = por %p52, %p53
      %p55 = scmp.ne.s32.totalorder %s41, %s42
      %p56 = scmp.eq.s32.totalorder %s22, 3
      %p57 = por %p55, %p56
      %p59 = scmp.ne.s32.totalorder %s42, %s58
      %p60 = scmp.eq.s32.totalorder %s22, 0
      %p61 = por %p59, %p60
      %s63 = sadd.s32 %s62, 1
      %p66 = scmp.eq.s32.totalorder %s16, 3
      %p67 = scmp.ne.s32.totalorder %s62, %s64
      %p68 = scmp.eq.s32.totalorder %s16, 0
      %p69 = por %p67, %p68
      %p70 = scmp.ne.s32.totalorder %s62, %s64
      %p71 = scmp.eq.s32.totalorder %s21, 3
      %p72 = por %p70, %p71
      %p73 = scmp.ne.s32.totalorder %s64, %s65
      %p74 = scmp.eq.s32.totalorder %s21, 0
      %p75 = por %p73, %p74
      %p76 = scmp.ne.s32.totalorder %s64, %s65
      %p77 = scmp.eq.s32.totalorder %s22, 3
      %p78 = por %p76, %p77
      %p80 = scmp.ne.s32.totalorder %s65, %s79
      %p81 = scmp.eq.s32.totalorder %s22, 0
      %p82 = por %p80, %p81
      %s84 = sadd.s32 %s83, 1
      %p87 = scmp.eq.s32.totalorder %s16, 3
      %p88 = scmp.ne.s32.totalorder %s83, %s85
      %p89 = scmp.eq.s32.totalorder %s16, 0
      %p90 = por %p88, %p89
      %p91 = scmp.ne.s32.totalorder %s83, %s85
      %p92 = scmp.eq.s32.totalorder %s21, 3
      %p93 = por %p91, %p92
      %p94 = scmp.ne.s32.totalorder %s85, %s86
      %p95 = scmp.eq.s32.totalorder %s21, 0
      %p96 = por %p94, %p95
      %p97 = scmp.ne.s32.totalorder %s85, %s86
      %p98 = scmp.eq.s32.totalorder %s22, 3
      %p99 = por %p97, %p98
      %p101 = scmp.ne.s32.totalorder %s86, %s100
      %p102 = scmp.eq.s32.totalorder %s22, 0
      %p103 = por %p101, %p102
      %s105 = sadd.s32 %s104, 1
      %p108 = scmp.eq.s32.totalorder %s16, 3
      %p109 = scmp.ne.s32.totalorder %s104, %s106
      %p110 = scmp.eq.s32.totalorder %s16, 0
      %p111 = por %p109, %p110
      %p112 = scmp.ne.s32.totalorder %s104, %s106
      %p113 = scmp.eq.s32.totalorder %s21, 3
      %p114 = por %p112, %p113
      %p115 = scmp.ne.s32.totalorder %s106, %s107
      %p116 = scmp.eq.s32.totalorder %s21, 0
      %p117 = por %p115, %p116
      %p118 = scmp.ne.s32.totalorder %s106, %s107
      %p119 = scmp.eq.s32.totalorder %s22, 3
      %p120 = por %p118, %p119
      %p122 = scmp.ne.s32.totalorder %s107, %s121
      %p123 = scmp.eq.s32.totalorder %s22, 0
      %p124 = por %p122, %p123
      %s125 = ssub.s32 %s23, %s35
      %s126 = ssub.s32 %s24, %s31
      %s127 = sor.u32 %s125, %s126
      %p128 = scmp.eq.s32.totalorder %s127, 0
      %s130 = sadd.s32 %s129, 1
      %s131 = scalar_select %p128, %s129, %s130
      %p134 = pneg %p128
      %p135 = scmp.eq.s32.totalorder %s16, 3
      %p136 = por %p134, %p135
      %p137 = scmp.ne.s32.totalorder %s129, %s132
      %p138 = scmp.eq.s32.totalorder %s16, 0
      %p139 = por %p137, %p138
      %p140 = scmp.ne.s32.totalorder %s129, %s132
      %p141 = scmp.eq.s32.totalorder %s21, 3
      %p142 = por %p140, %p141
      %p143 = scmp.ne.s32.totalorder %s132, %s133
      %p144 = scmp.eq.s32.totalorder %s21, 0
      %p145 = por %p143, %p144
      %p146 = scmp.ne.s32.totalorder %s132, %s133
      %p147 = scmp.eq.s32.totalorder %s22, 3
      %p148 = por %p146, %p147
      %p150 = scmp.ne.s32.totalorder %s133, %s149
      %p151 = scmp.eq.s32.totalorder %s22, 0
      %p152 = por %p150, %p151
      %p153 = scmp.le.s32.totalorder 1, %s16
      %p154 = scmp.lt.s32.totalorder %s16, 5
      %p155 = pnand %p153, %p154
      %p156 = pneg %p155
      // Predicated region
      $region9: #{tpu_custom_call.1} parent=5 // pred_check
        _
      $region10: #{tpu_custom_call.1} parent=5 // pred_check_branch
        %158 = sbr.rel (%p155) target = $region12
      $region11: #{tpu_custom_call.1} parent=5 // pred_region
        %s159 = ssub.s32 %s16, 1
        // Predicated region
        $region13: #{tpu_custom_call.1} parent=11 // pred_check
          %p160 = pneg %p75
        $region14: #{tpu_custom_call.1} parent=11 // pred_check_branch
          %162 = sbr.rel (%p160) target = $region16
        $region15: #{tpu_custom_call.1} parent=11 // pred_region
          _
        $region16: #{tpu_custom_call.1} parent=11 // pred_fallthru
          _
        // Predicated region
        $region17: #{tpu_custom_call.1} parent=11 // pred_check
          %p163 = pneg %p96
        $region18: #{tpu_custom_call.1} parent=11 // pred_check_branch
          %165 = sbr.rel (%p163) target = $region20
        $region19: #{tpu_custom_call.1} parent=11 // pred_region
          _
        $region20: #{tpu_custom_call.1} parent=11 // pred_fallthru
          _
        // Predicated region
        $region21: #{tpu_custom_call.1} parent=11 // pred_check
          %p166 = pneg %p117
        $region22: #{tpu_custom_call.1} parent=11 // pred_check_branch
          %168 = sbr.rel (%p166) target = $region24
        $region23: #{tpu_custom_call.1} parent=11 // pred_region
          _
        $region24: #{tpu_custom_call.1} parent=11 // pred_fallthru
          _
      $region12: #{tpu_custom_call.1} parent=5 // pred_fallthru
        _
      %p169 = scmp.lt.s32.totalorder %s16, 4
      // Predicated region
      $region25: #{tpu_custom_call.1} parent=5 // pred_check
        %p170 = pneg %p169
      $region26: #{tpu_custom_call.1} parent=5 // pred_check_branch
        %172 = sbr.rel (%p170) target = $region28
      $region27: #{tpu_custom_call.1} parent=5 // pred_region
        // Predicated region
        $region29: #{tpu_custom_call.1} parent=27 // pred_check
          %p173 = pneg %p48
        $region30: #{tpu_custom_call.1} parent=27 // pred_check_branch
          %175 = sbr.rel (%p173) target = $region32
        $region31: #{tpu_custom_call.1} parent=27 // pred_region
          %s176 = sand.u32 %s38, 1
          %s177 = scalar_lea.sflag [#allocation5], %s176
          %s178 = sand.u32 %s38, 1
          %s179 = smul.addr %s178, 10
          %s180 = scalar_lea.vmem [#allocation4], %s179
          %s182 = ssub.s32 160, 160
          %183 = vsyncadd %s177, %s182
          %s184 = smul.addr %s23, 5
          %s185 = smul.addr %s184, 32
          %s186 = scalar_lea.hbm %s0, %s185
          %s188 = sshll.u32 %s180, 4
          %s189 = int_to_ptr.vmem [resolvable:$true] %s188
          %191 = dma.hbm_to_vmem [thread:$0]  %s186, 160, %s189, %s177
        $region32: #{tpu_custom_call.1} parent=27 // pred_fallthru
          _
      $region28: #{tpu_custom_call.1} parent=5 // pred_fallthru
        _
      %p192 = scmp.le.s32.totalorder 1, %s16
      %p193 = scmp.lt.s32.totalorder %s16, 5
      %p194 = pnand %p192, %p193
      %p195 = pneg %p194
      // Predicated region
      $region33: #{tpu_custom_call.1} parent=5 // pred_check
        _
      $region34: #{tpu_custom_call.1} parent=5 // pred_check_branch
        %197 = sbr.rel (%p194) target = $region36
      $region35: #{tpu_custom_call.1} parent=5 // pred_region
        %s198 = ssub.s32 %s16, 1
        %s199 = sand.u32 %s41, 1
        %s200 = scalar_lea.sflag [#allocation5], %s199
        %s201 = sand.u32 %s41, 1
        %s202 = smul.addr %s201, 10
        %s203 = scalar_lea.vmem [#allocation4], %s202
        // Predicated region
        $region37: #{tpu_custom_call.1} parent=35 // pred_check
          %p204 = pneg %p54
        $region38: #{tpu_custom_call.1} parent=35 // pred_check_branch
          %206 = sbr.rel (%p204) target = $region40
        $region39: #{tpu_custom_call.1} parent=35 // pred_region
          %207 = dma.done %s200, 160
        $region40: #{tpu_custom_call.1} parent=35 // pred_fallthru
          _
        %s208 = sand.u32 %s41, 1
        %s209 = scalar_lea.sflag [#allocation5], %s208
        %s210 = sand.u32 %s41, 1
        %s211 = smul.addr %s210, 10
        %s212 = scalar_lea.vmem [#allocation4], %s211
        %p213 = pneg %p54
        %p214 = pneg %p51
        %p215 = pneg %p75
        %p216 = pneg %p72
        %p217 = pneg %p96
        %p218 = pneg %p93
        %p219 = pneg %p117
        %p220 = pneg %p114
        %p221 = pneg %p145
        %p222 = pneg %p142
        %s223 = sand.u32 %s132, 1
        %s224 = scalar_lea.sflag [#allocation6], %s223
        %s225 = sand.u32 %s132, 1
        %s226 = smul.addr %s225, 16
        %s227 = scalar_lea.vmem [#allocation7], %s226
        %s228 = smul.u32 2, %s26
        %s230 = smul.u32 %s26, 256
        %s231 = sshra.s32 %s230, 7
        %s232 = sand.u32 %s230, 127
        %s233 = smul.addr %s231, 2
        %s234 = scalar_lea.vmem %s203, %s233 [#allocation4]
        %v235 = vld [vmem:[%s234] sm:$0x3f]
        %236 = vst [vmem:[#allocation2] sm:$0x3f] %v235
        %v237 = vld [vmem:[#allocation2] sm:$0xf]
        %v240 = vunpack.c.l.s4 1983009808
        %v241 = vunpack.c.0.s8 %v240
        %v242 = vlaneseq
        %v243 = vshrl.u32 %v242, 7
        %v244 = vsub.s32 %v241, %v243
        %v245 = vrot.slane %v237, %v244
        %247 = vst [vmem:[#allocation3] sm:$0x33] %v245
        %v248 = vld [vmem:[#allocation2] sm:$0x3f]
        %v250 = vcombine.low %v248, %v248
        %v252 = vunpack.c.l.s4 1983009808
        %v253 = vunpack.c.0.s8 %v252
        %v254 = vlaneseq
        %v255 = vshrl.u32 %v254, 7
        %v256 = vsub.s32 %v253, %v255
        %v257 = vrot.slane %v250, %v256
        %v259 = vunpack.c.l.s4 1983009808
        %v260 = vunpack.c.0.s8 %v259
        %v261 = vlaneseq
        %v262 = vshrl.u32 %v261, 7
        %v263 = vsub.s32 %v260, %v262
        %v264 = vrot.slane %v248, %v263
        %265 = vrot.lane.b32.xlu0 %v257, 127
        %v266 = vpop.permute.xlu0 %265
        %267 = vrot.lane.b32.xlu0 %v264, 127
        %v268 = vpop.permute.xlu0 %267
        %v269 = vrot.slane %v266, 4
        %v270 = vrot.slane %v268, 4
        %vm271 = vcmask 1043456
        %v272 = vsel %vm271, %v269, %v270
        %vm273 = vcmask 1039360
        %v274 = vsel %vm273, %v266, %v272
        %276 = vst [vmem:[#allocation3] sm:$0xcc] %v274
        %v277 = vld [vmem:[#allocation2] sm:$0x3f]
        %v279 = vcombine.high %v277, %v277
        %v281 = vunpack.c.l.s4 1983009808
        %v282 = vunpack.c.0.s8 %v281
        %v283 = vlaneseq
        %v284 = vshrl.u32 %v283, 7
        %v285 = vsub.s32 %v282, %v284
        %v286 = vrot.slane %v277, %v285
        %v288 = vunpack.c.l.s4 1983009808
        %v289 = vunpack.c.0.s8 %v288
        %v290 = vlaneseq
        %v291 = vshrl.u32 %v290, 7
        %v292 = vsub.s32 %v289, %v291
        %v293 = vrot.slane %v279, %v292
        %294 = vrot.lane.b32.xlu0 %v286, 126
        %v295 = vpop.permute.xlu0 %294
        %296 = vrot.lane.b32.xlu0 %v293, 126
        %v297 = vpop.permute.xlu0 %296
        %v298 = vrot.slane %v295, 4
        %v299 = vrot.slane %v297, 4
        %v300 = vsel %vm271, %v298, %v299
        %vm301 = vcmask 1031168
        %v302 = vsel %vm301, %v295, %v300
        %304 = vst [vmem:[#allocation3 + $0x8] sm:$0x33] %v302
        %v305 = vld [vmem:[#allocation2] sm:$0x3f]
        %v307 = vcombine.low %v305, %v305
        %v309 = vunpack.c.l.s4 1983009808
        %v310 = vunpack.c.0.s8 %v309
        %v311 = vlaneseq
        %v312 = vshrl.u32 %v311, 7
        %v313 = vsub.s32 %v310, %v312
        %v314 = vrot.slane %v307, %v313
        %v316 = vunpack.c.l.s4 1983009808
        %v317 = vunpack.c.0.s8 %v316
        %v318 = vlaneseq
        %v319 = vshrl.u32 %v318, 7
        %v320 = vsub.s32 %v317, %v319
        %v321 = vrot.slane %v305, %v320
        %322 = vrot.lane.b32.xlu0 %v314, 110
        %v323 = vpop.permute.xlu0 %322
        %324 = vrot.lane.b32.xlu0 %v321, 110
        %v325 = vpop.permute.xlu0 %324
        %v326 = vrot.slane %v323, 4
        %v327 = vrot.slane %v325, 4
        %v328 = vsel %vm271, %v326, %v327
        %vm329 = vcmask 900096
        %v330 = vsel %vm329, %v323, %v328
        %332 = vst [vmem:[#allocation3 + $0x8] sm:$0xcc] %v330
        %v333 = vld [vmem:[#allocation2] sm:$0x3f]
        %v335 = vcombine.high %v333, %v333
        %v337 = vunpack.c.l.s4 1983009808
        %v338 = vunpack.c.0.s8 %v337
        %v339 = vlaneseq
        %v340 = vshrl.u32 %v339, 7
        %v341 = vsub.s32 %v338, %v340
        %v342 = vrot.slane %v333, %v341
        %v344 = vunpack.c.l.s4 1983009808
        %v345 = vunpack.c.0.s8 %v344
        %v346 = vlaneseq
        %v347 = vshrl.u32 %v346, 7
        %v348 = vsub.s32 %v345, %v347
        %v349 = vrot.slane %v335, %v348
        %350 = vrot.lane.b32.xlu0 %v342, 109
        %v351 = vpop.permute.xlu0 %350
        %352 = vrot.lane.b32.xlu0 %v349, 109
        %v353 = vpop.permute.xlu0 %352
        %v354 = vrot.slane %v351, 4
        %v355 = vrot.slane %v353, 4
        %v356 = vsel %vm271, %v354, %v355
        %vm357 = vcmask 891904
        %v358 = vsel %vm357, %v351, %v356
        %360 = vst [vmem:[#allocation3 + $0x10] sm:$0x33] %v358
        %v361 = vld [vmem:[#allocation2] sm:$0x3f]
        %v363 = vcombine.low %v361, %v361
        %v365 = vunpack.c.l.s4 1983009808
        %v366 = vunpack.c.0.s8 %v365
        %v367 = vlaneseq
        %v368 = vshrl.u32 %v367, 7
        %v369 = vsub.s32 %v366, %v368
        %v370 = vrot.slane %v363, %v369
        %v372 = vunpack.c.l.s4 1983009808
        %v373 = vunpack.c.0.s8 %v372
        %v374 = vlaneseq
        %v375 = vshrl.u32 %v374, 7
        %v376 = vsub.s32 %v373, %v375
        %v377 = vrot.slane %v361, %v376
        %378 = vrot.lane.b32.xlu0 %v370, 108
        %v379 = vpop.permute.xlu0 %378
        %380 = vrot.lane.b32.xlu0 %v377, 108
        %v381 = vpop.permute.xlu0 %380
        %v382 = vrot.slane %v379, 4
        %v383 = vrot.slane %v381, 4
        %v384 = vsel %vm271, %v382, %v383
        %vm385 = vcmask 883712
        %v386 = vsel %vm385, %v379, %v384
        %388 = vst [vmem:[#allocation3 + $0x10] sm:$0xcc] %v386
        %v389 = vld [vmem:[#allocation2] sm:$0x3f]
        %v391 = vcombine.high %v389, %v389
        %v393 = vunpack.c.l.s4 1983009808
        %v394 = vunpack.c.0.s8 %v393
        %v395 = vlaneseq
        %v396 = vshrl.u32 %v395, 7
        %v397 = vsub.s32 %v394, %v396
        %v398 = vrot.slane %v389, %v397
        %v400 = vunpack.c.l.s4 1983009808
        %v401 = vunpack.c.0.s8 %v400
        %v402 = vlaneseq
        %v403 = vshrl.u32 %v402, 7
        %v404 = vsub.s32 %v401, %v403
        %v405 = vrot.slane %v391, %v404
        %406 = vrot.lane.b32.xlu0 %v398, 92
        %v407 = vpop.permute.xlu0 %406
        %408 = vrot.lane.b32.xlu0 %v405, 92
        %v409 = vpop.permute.xlu0 %408
        %v410 = vrot.slane %v407, 4
        %v411 = vrot.slane %v409, 4
        %v412 = vsel %vm271, %v410, %v411
        %vm413 = vcmask 752640
        %v414 = vsel %vm413, %v407, %v412
        %416 = vst [vmem:[#allocation3 + $0x18] sm:$0x33] %v414
        %v417 = vld [vmem:[#allocation2] sm:$0x3f]
        %v419 = vcombine.low %v417, %v417
        %v421 = vunpack.c.l.s4 1983009808
        %v422 = vunpack.c.0.s8 %v421
        %v423 = vlaneseq
        %v424 = vshrl.u32 %v423, 7
        %v425 = vsub.s32 %v422, %v424
        %v426 = vrot.slane %v419, %v425
        %v428 = vunpack.c.l.s4 1983009808
        %v429 = vunpack.c.0.s8 %v428
        %v430 = vlaneseq
        %v431 = vshrl.u32 %v430, 7
        %v432 = vsub.s32 %v429, %v431
        %v433 = vrot.slane %v417, %v432
        %434 = vrot.lane.b32.xlu0 %v426, 91
        %v435 = vpop.permute.xlu0 %434
        %436 = vrot.lane.b32.xlu0 %v433, 91
        %v437 = vpop.permute.xlu0 %436
        %v438 = vrot.slane %v435, 4
        %v439 = vrot.slane %v437, 4
        %v440 = vsel %vm271, %v438, %v439
        %vm441 = vcmask 744448
        %v442 = vsel %vm441, %v435, %v440
        %444 = vst [vmem:[#allocation3 + $0x18] sm:$0xcc] %v442
        %v445 = vld [vmem:[#allocation2] sm:$0x3f]
        %v447 = vcombine.high %v445, %v445
        %v449 = vunpack.c.l.s4 1983009808
        %v450 = vunpack.c.0.s8 %v449
        %v451 = vlaneseq
        %v452 = vshrl.u32 %v451, 7
        %v453 = vsub.s32 %v450, %v452
        %v454 = vrot.slane %v445, %v453
        %v456 = vunpack.c.l.s4 1983009808
        %v457 = vunpack.c.0.s8 %v456
        %v458 = vlaneseq
        %v459 = vshrl.u32 %v458, 7
        %v460 = vsub.s32 %v457, %v459
        %v461 = vrot.slane %v447, %v460
        %462 = vrot.lane.b32.xlu0 %v454, 90
        %v463 = vpop.permute.xlu0 %462
        %464 = vrot.lane.b32.xlu0 %v461, 90
        %v465 = vpop.permute.xlu0 %464
        %v466 = vrot.slane %v463, 4
        %v467 = vrot.slane %v465, 4
        %v468 = vsel %vm271, %v466, %v467
        %vm469 = vcmask 736256
        %v470 = vsel %vm469, %v463, %v468
        %472 = vst [vmem:[#allocation3 + $0x20] sm:$0x33] %v470
        %v473 = vld [vmem:[%s1] sm:$0xf]
        %v474 = vld [vmem:[#allocation3] sm:$0xff]
        %v475 = vld [vmem:[#allocation3 + $0x8] sm:$0xff]
        %v476 = vld [vmem:[#allocation3 + $0x10] sm:$0xff]
        %v477 = vld [vmem:[#allocation3 + $0x18] sm:$0xff]
        %v478 = vld [vmem:[#allocation3 + $0x20] sm:$0x33]
        %v484 = vunpack.c.l.b16 %v474
        %v485 = vunpack.c.h.b16 %v474
        %v486 = vunpack.c.l.b16 %v475
        %v487 = vunpack.c.h.b16 %v475
        %v488 = vunpack.c.l.b16 %v476
        %v489 = vunpack.c.h.b16 %v476
        %v490 = vunpack.c.l.b16 %v477
        %v491 = vunpack.c.h.b16 %v477
        %v492 = vunpack.c.l.b16 %v478
        %v493 = vunpack.c.h.b16 %v478
        %v494 = vpack.c.b16 %v486, %v484
        %v495 = vpack.c.b16 %v487, %v485
        %v496 = vpack.c.b16 %v490, %v488
        %v497 = vpack.c.b16 %v491, %v489
        %v498 = vpack.c.b16 %v492, %v492
        %v499 = vpack.c.b16 %v493, %v493
        %vm504 = vcmask 293888
        %v506 = vsel %vm504, %v473, 0
        %vm508 = vcmask 1041408
        %v510 = vsel %vm508, %v498, 0
        %v513 = vsel %vm508, %v499, 0
        %515 = vmatprep.subr.bf16.mxu0 0
        %516 = vmatpush1.bf16.msra.mxu0 0
        %517 = vmatprep.subr.bf16.mxu0 0
        %518 = vmatpush1.bf16.msra.mxu0 0
        %519 = vmatprep.subr.bf16.mxu0 0
        %520 = vmatpush1.bf16.msra.mxu0 0
        %521 = vmatprep.subr.bf16.mxu0 0
        %522 = vmatpush1.bf16.msra.mxu0 0
        %523 = vmatprep.subr.bf16.mxu0 0
        %524 = vmatpush1.bf16.msra.mxu0 0
        %525 = vmatprep.subr.bf16.mxu0 %v513
        %526 = vmatpush1.bf16.msra.mxu0 %v510
        %527 = vmatprep.subr.bf16.mxu0 %v497
        %528 = vmatpush1.bf16.msra.mxu0 %v496
        %529 = vmatprep.subr.bf16.mxu0 %v495
        %530 = vmatpush1.bf16.msra.mxu0 %v494
        %531 = vmatprep.subr.bf16.mxu0 0
        %532 = vmatpush2.bf16.msra.mxu0 0
        %533 = vmatprep.subr.bf16.mxu0 0
        %534 = vmatpush2.bf16.msra.mxu0 0
        %535 = vmatprep.subr.bf16.mxu0 0
        %536 = vmatpush2.bf16.msra.mxu0 0
        %537 = vmatprep.subr.bf16.mxu0 0
        %538 = vmatpush2.bf16.msra.mxu0 0
        %539 = vmatprep.subr.bf16.mxu0 0
        %540 = vmatpush2.bf16.msra.mxu0 0
        %541 = vmatprep.subr.bf16.mxu0 0
        %542 = vmatpush2.bf16.msra.mxu0 0
        %543 = vmatprep.subr.bf16.mxu0 0
        %544 = vmatpush2.bf16.msra.mxu0 0
        %545 = vmatprep.subr.bf16.mxu0 0
        %546 = vmatpush2.bf16.msra.mxu0 0
        %547 = vmatprep.mubr.bf16.mxu0 0
        %548 = vmatmul.mubr.bf16.gmra.mxu0 %v506
        %v549 = vpop.f32.mrf.mxu0
        %v550 = vadd.f32 0.0, %v549
        %v551 = vpop.f32.mrf.mxu0
        %v552 = vadd.f32 0.0, %v551
        %v553 = vpop.f32.mrf.mxu0
        %v554 = vpop.f32.mrf.mxu0
        %555 = vdwg.mxu0
        %v556 = vld [vmem:[%s2] sm:$0xff]
        %558 = vset.pattern.permute.xlu0 0
        %559 = vperm.xlu0 %558, %v556
        %v560 = vpop.permute.xlu0 %559
        %v562 = vmul.f32 %v550, %v560
        %v563 = vmul.f32 %v552, %v560
        %v564 = vld [vmem:[%s3] sm:$0xff]
        %566 = vset.pattern.permute.xlu0 0
        %567 = vperm.xlu0 %566, %v564
        %v568 = vpop.permute.xlu0 %567
        %v570 = vadd.f32 %v562, %v568
        %v571 = vadd.f32 %v563, %v568
        %v572 = vmax.f32 %v570, 0.0
        %v573 = vmax.f32 %v571, 0.0
        %574 = vst [vmem:[%s227] sm:$0xff] %v572
        %575 = vst [vmem:[%s227 + $0x8] sm:$0xff] %v573
        %s576 = sand.u32 %s132, 1
        %s577 = scalar_lea.sflag [#allocation6], %s576
        %s578 = sand.u32 %s132, 1
        %s579 = smul.addr %s578, 16
        %s580 = scalar_lea.vmem [#allocation7], %s579
        // Predicated region
        $region41: #{tpu_custom_call.1} parent=35 // pred_check
          %p581 = pneg %p142
        $region42: #{tpu_custom_call.1} parent=35 // pred_check_branch
          %583 = sbr.rel (%p581) target = $region44
        $region43: #{tpu_custom_call.1} parent=35 // pred_region
          %s584 = smul.u32 2, %s26
          %s586 = ssub.s32 256, 256
          %587 = vsyncadd %s577, %s586
          %s588 = smul.addr %s25, 4
          %s589 = sadd.s32 %s584, %s588
          %s590 = smul.addr %s589, 128
          %s591 = scalar_lea.hbm %s4, %s590
          %s593 = sshll.u32 %s580, 4
          %s594 = int_to_ptr.vmem [resolvable:$true] %s593
          %596 = dma.vmem_to_hbm [thread:$0]  %s594, 256, %s591, %s577
        $region44: #{tpu_custom_call.1} parent=35 // pred_fallthru
          _
      $region36: #{tpu_custom_call.1} parent=5 // pred_fallthru
        _
      %p597 = scmp.le.s32.totalorder 2, %s16
      // Predicated region
      $region45: #{tpu_custom_call.1} parent=5 // pred_check
        %p598 = pneg %p597
      $region46: #{tpu_custom_call.1} parent=5 // pred_check_branch
        %600 = sbr.rel (%p598) target = $region48
      $region47: #{tpu_custom_call.1} parent=5 // pred_region
        %s601 = ssub.s32 %s16, 2
        // Predicated region
        $region49: #{tpu_custom_call.1} parent=47 // pred_check
          %p602 = pneg %p148
        $region50: #{tpu_custom_call.1} parent=47 // pred_check_branch
          %604 = sbr.rel (%p602) target = $region52
        $region51: #{tpu_custom_call.1} parent=47 // pred_region
          %s605 = sand.u32 %s133, 1
          %s606 = scalar_lea.sflag [#allocation6], %s605
          %s607 = sand.u32 %s133, 1
          %s608 = smul.addr %s607, 16
          %s609 = scalar_lea.vmem [#allocation7], %s608
          %610 = dma.done %s606, 256
        $region52: #{tpu_custom_call.1} parent=47 // pred_fallthru
          _
      $region48: #{tpu_custom_call.1} parent=5 // pred_fallthru
        _
    $region6: #{tpu_custom_call.1} parent=1 // loop_footer
      %s20 = sadd.s32 1, %s16
    $region7: #{tpu_custom_call.1} parent=1 // loop_footer_branch
      %15 = sbr.rel target = $region3
    $region8: #{tpu_custom_call.1} parent=1 // loop_exit
      _
    %611 = vsyncpa [#allocation5], 1
    %s612 = scalar_lea.sflag [#allocation5], 1
    %613 = vsyncpa %s612, 1
    %614 = vsyncpa [#allocation6], 1
    %s615 = scalar_lea.sflag [#allocation6], 1
    %616 = vsyncpa %s615, 1

</llo_original>
